<compile_context>
chip_gen: v7x
topology: tpu7x:2x2x1
jax: 0.10.0
libtpu: 0.0.40
codegen_flags: <defaults>
</compile_context>

<pallas_src>
import jax
import jax.numpy as jnp
import numpy as np
from jax.experimental import pallas as pl
from jax.experimental.pallas import tpu as pltpu

NBINS = 32
SIGMA = 0.01
# exp(-0.5*((v-b)/sigma)^2) == exp((v-b)^2 * NEG_HALF_INV_SIGMA_SQ)
NEG_HALF_INV_SIGMA_SQ = -0.5 / (SIGMA * SIGMA)   # -5000.0, compile-time constant
FLOOR = 1.2e-38                                  # just above f32 FLT_MIN (TPU flushes subnormals)

# Compile-time bins: torch.linspace(-1, 1, 32).
_BIN_VALUES = tuple(float(b) for b in np.linspace(-1.0, 1.0, NBINS))


def _entropy_kernel(vals_ref, out_ref):
    # vals_ref: (M, tile_n)  patch samples on sublanes, patch index lane-dense.
    # out_ref:  (1, tile_n)  per-patch entropy (lane-dense writeback).
    vals = vals_ref[...]                 # lives in vregs across the unrolled bin loop
    s_acc = None                         # S = sum_b s_b
    t_acc = None                         # T = sum_b s_b * log(s_b)
    for bin_val in _BIN_VALUES:
        d = vals - bin_val                                    # VALU
        kv = jnp.exp(d * d * NEG_HALF_INV_SIGMA_SQ)           # VALU x2 + EUP exp
        s_b = jnp.sum(kv, axis=0, keepdims=True)              # XLU sublane reduce -> (1, tile_n)
        # s_b == 0 -> 0 * finite == 0 exactly, so no extra where() is needed.
        t_b = s_b * jnp.log(jnp.maximum(s_b, FLOOR))
        s_acc = s_b if s_acc is None else s_acc + s_b
        t_acc = t_b if t_acc is None else t_acc + t_b

    # entropy = -sum_b p_b*log(p_b) with p_b = s_b / S   ==   log(S) - T/S
    # (the 1/M mean and the pdf normalization cancel; torch's 1e-40 epsilons
    #  are subnormal in f32 and flushed on TPU, so they contribute nothing).
    safe_s = jnp.maximum(s_acc, FLOOR)
    ent = jnp.log(safe_s) - t_acc / safe_s
    out_ref[...] = jnp.where(s_acc > 0.0, ent, 0.0)           # (1, tile_n)


def _round_up(x: int, m: int) -> int:
    return (x + m - 1) // m * m


def _pick_tile_n(N: int, M: int) -> int:
    # vreg-pressure cap: the unrolled loop keeps roughly 2 * M * tile_n * 4 B
    # of values live (input + one temporary); keep that well under the
    # 64 x 4 KiB register file (identical on v5e/v6e/v7x).
    if M <= 16:
        cap = 1024
    elif M <= 32:
        cap = 512
    elif M <= 64:
        cap = 256
    else:
        cap = 128   # very large patch sizes would want M-axis chunking next
    # Target >= 2 grid steps when N allows, so the "parallel" grid axis can
    # shard across v7x's two TensorCores (v5e/v6e have a single TC).
    target = _round_up(max(pl.cdiv(N, 2), 1), 128)
    return max(128, min(cap, target))


def _entropy_lanes(vals_t: jax.Array) -> jax.Array:
    """vals_t: (M, N) f32 -> per-column entropy, shape (N,) f32."""
    M, N = vals_t.shape
    tile_n = _pick_tile_n(N, M)
    n_pad = _round_up(N, tile_n)
    if n_pad != N:
        # Padded columns (zeros) produce finite garbage entropies, sliced off below.
        vals_t = jnp.pad(vals_t, ((0, 0), (0, n_pad - N)))

    out = pl.pallas_call(
        _entropy_kernel,
        out_shape=jax.ShapeDtypeStruct((1, n_pad), jnp.float32),
        grid=(n_pad // tile_n,),
        in_specs=[pl.BlockSpec((M, tile_n), lambda i: (0, i))],
        out_specs=pl.BlockSpec((1, tile_n), lambda i: (0, i)),
        compiler_params=pltpu.CompilerParams(
            dimension_semantics=("parallel",)),
    )(vals_t.astype(jnp.float32))
    return out[0, :N]


def _grayscale(inputs: jax.Array) -> jax.Array:
    return (0.2989 * inputs[:, 0, :, :]
            + 0.587 * inputs[:, 1, :, :]
            + 0.114 * inputs[:, 2, :, :]).astype(jnp.float32)


def _unfold_to_mn(gray: jax.Array, P: int) -> jax.Array:
    """nn.Unfold(kernel=(P,P), stride=P) + torch .view(B*patch_num, -1),
    emitted already transposed to (M, N) so the kernel input is lane-dense."""
    B, H, W = gray.shape
    hh, ww = H // P, W // P
    M, L = P * P, hh * ww
    patches = gray.reshape(B, hh, P, ww, P)          # [b, ph, kh, pw, kw]
    if M == L:
        # torch's row-major .view keeps whole kernel-index runs per row exactly
        # when M == L, so unfold + view + transpose fold into one permutation
        # that lands directly in (M, B*L) layout.
        return jnp.transpose(patches, (1, 3, 0, 2, 4)).reshape(M, B * L)
    # General case: the .view reinterprets (B, M, L) memory as (B*L, M), mixing
    # kernel and patch indices; that reinterpretation is not a coordinate
    # permutation, so one extra transpose pass is unavoidable here.
    unfolded = jnp.transpose(patches, (0, 2, 4, 1, 3)).reshape(B, M * L)
    return jnp.transpose(unfolded.reshape(B, L, M), (2, 0, 1)).reshape(M, B * L)


def entropy_forward(inputs: jax.Array, patch_size: int,
                    image_width: int, image_height: int) -> jax.Array:
    """Reproduces Entropy.forward. inputs: (B, C, H, W) NCHW, C >= 3."""
    B = inputs.shape[0]
    P = patch_size
    W, H = image_width, image_height
    hw = W // P
    gray = _grayscale(inputs)                        # (B, H, W)
    vals_t = _unfold_to_mn(gray, P)                  # (M, B * patch_num)
    ent = _entropy_lanes(vals_t)                     # (B * patch_num,)
    return ent.reshape(B, hw, hw)


def _entropy_forward_ref(inputs, patch_size, image_width, image_height):
    """Pure-JAX reference with the original torch math (correctness check)."""
    B = inputs.shape[0]
    P = patch_size
    W, H = image_width, image_height
    hw = W // P
    patch_num = (W * H) // (P * P)
    gray = (0.2989 * inputs[:, 0] + 0.587 * inputs[:, 1]
            + 0.114 * inputs[:, 2]).astype(jnp.float32)
    hh, ww = H // P, W // P
    unfolded = jnp.transpose(gray.reshape(B, hh, P, ww, P),
                             (0, 2, 4, 1, 3)).reshape(B, P * P, hh * ww)
    values = unfolded.reshape(B * patch_num, -1)
    bins = jnp.linspace(-1.0, 1.0, NBINS, dtype=jnp.float32)
    res = values[:, None, :] - bins[None, :, None]
    kv = jnp.exp(-0.5 * (res / SIGMA) ** 2)
    pdf = jnp.mean(kv, axis=2)
    pdf = pdf / (jnp.sum(pdf, axis=1, keepdims=True) + 1e-40) + 1e-40
    plogp = jnp.where(pdf > 0.0, pdf * jnp.log(pdf), 0.0)
    ent = -jnp.sum(plogp, axis=1)
    return ent.reshape(B, hw, hw)


if __name__ == "__main__":
    key = jax.random.PRNGKey(0)
    B, C, H, W = 2, 3, 16, 16
    x = jax.random.uniform(key, (B, C, H, W), dtype=jnp.float32,
                           minval=-1.0, maxval=1.0)

    # Case 1: patch_size = 4 (M == L fast layout path).
    P = 4
    out = jax.block_until_ready(entropy_forward(x, P, W, H))
    assert out.shape == (B, W // P, H // P), out.shape
    assert bool(jnp.all(jnp.isfinite(out)))
    ref = _entropy_forward_ref(x, P, W, H)
    assert bool(jnp.allclose(out, ref, atol=1e-4, rtol=1e-4)), (out, ref)

    # Case 2: patch_size = 2 (M != L, exercises the general unfold/view path).
    P2 = 2
    out2 = jax.block_until_ready(entropy_forward(x, P2, W, H))
    assert out2.shape == (B, W // P2, H // P2), out2.shape
    assert bool(jnp.all(jnp.isfinite(out2)))
    ref2 = _entropy_forward_ref(x, P2, W, H)
    assert bool(jnp.allclose(out2, ref2, atol=1e-4, rtol=1e-4)), (out2, ref2)

    print("KERNEL_OK")
</pallas_src>

<mosaic_0001>
module attributes {stable_mosaic.version = 11 : i64} {
  func.func @_entropy_kernel(%arg0: i32, %arg1: memref<16x128xf32, #tpu.memory_space<vmem>>, %arg2: memref<1x128xf32, #tpu.memory_space<vmem>>) attributes {dimension_semantics = [#tpu.dimension_semantics<parallel>], iteration_bounds = array<i64: 1>, scalar_prefetch = 0 : i64, scratch_operands = 0 : i64, tpu.core_type = #tpu.core_type<tc>, window_params = [{transform_indices = @transform_0, window_bounds = array<i64: 16, 128>}, {transform_indices = @transform_1, window_bounds = array<i64: 1, 128>}]} {
    %c0 = arith.constant 0 : index
    %c0_0 = arith.constant 0 : index
    %0 = vector.load %arg1[%c0, %c0_0] : memref<16x128xf32, #tpu.memory_space<vmem>>, vector<16x128xf32>
    %cst = arith.constant -1.000000e+00 : f32
    %1 = vector.broadcast %cst : f32 to vector<16x128xf32>
    %2 = arith.subf %0, %1 : vector<16x128xf32>
    %3 = arith.mulf %2, %2 : vector<16x128xf32>
    %cst_1 = arith.constant -5.000000e+03 : f32
    %4 = vector.broadcast %cst_1 : f32 to vector<16x128xf32>
    %5 = arith.mulf %3, %4 : vector<16x128xf32>
    %6 = math.exp %5 : vector<16x128xf32>
    %cst_2 = arith.constant dense<0.000000e+00> : vector<128xf32>
    %7 = vector.multi_reduction <add>, %6, %cst_2 [0] : vector<16x128xf32> to vector<128xf32>
    %8 = vector.shape_cast %7 : vector<128xf32> to vector<1x128xf32>
    %cst_3 = arith.constant 1.200000e-38 : f32
    %9 = vector.broadcast %cst_3 : f32 to vector<1x128xf32>
    %10 = arith.maximumf %8, %9 : vector<1x128xf32>
    %11 = math.log %10 : vector<1x128xf32>
    %12 = arith.mulf %8, %11 : vector<1x128xf32>
    %cst_4 = arith.constant -0.935483872 : f32
    %13 = vector.broadcast %cst_4 : f32 to vector<16x128xf32>
    %14 = arith.subf %0, %13 : vector<16x128xf32>
    %15 = arith.mulf %14, %14 : vector<16x128xf32>
    %cst_5 = arith.constant -5.000000e+03 : f32
    %16 = vector.broadcast %cst_5 : f32 to vector<16x128xf32>
    %17 = arith.mulf %15, %16 : vector<16x128xf32>
    %18 = math.exp %17 : vector<16x128xf32>
    %cst_6 = arith.constant dense<0.000000e+00> : vector<128xf32>
    %19 = vector.multi_reduction <add>, %18, %cst_6 [0] : vector<16x128xf32> to vector<128xf32>
    %20 = vector.shape_cast %19 : vector<128xf32> to vector<1x128xf32>
    %cst_7 = arith.constant 1.200000e-38 : f32
    %21 = vector.broadcast %cst_7 : f32 to vector<1x128xf32>
    %22 = arith.maximumf %20, %21 : vector<1x128xf32>
    %23 = math.log %22 : vector<1x128xf32>
    %24 = arith.mulf %20, %23 : vector<1x128xf32>
    %25 = arith.addf %8, %20 : vector<1x128xf32>
    %26 = arith.addf %12, %24 : vector<1x128xf32>
    %cst_8 = arith.constant -0.870967745 : f32
    %27 = vector.broadcast %cst_8 : f32 to vector<16x128xf32>
    %28 = arith.subf %0, %27 : vector<16x128xf32>
    %29 = arith.mulf %28, %28 : vector<16x128xf32>
    %cst_9 = arith.constant -5.000000e+03 : f32
    %30 = vector.broadcast %cst_9 : f32 to vector<16x128xf32>
    %31 = arith.mulf %29, %30 : vector<16x128xf32>
    %32 = math.exp %31 : vector<16x128xf32>
    %cst_10 = arith.constant dense<0.000000e+00> : vector<128xf32>
    %33 = vector.multi_reduction <add>, %32, %cst_10 [0] : vector<16x128xf32> to vector<128xf32>
    %34 = vector.shape_cast %33 : vector<128xf32> to vector<1x128xf32>
    %cst_11 = arith.constant 1.200000e-38 : f32
    %35 = vector.broadcast %cst_11 : f32 to vector<1x128xf32>
    %36 = arith.maximumf %34, %35 : vector<1x128xf32>
    %37 = math.log %36 : vector<1x128xf32>
    %38 = arith.mulf %34, %37 : vector<1x128xf32>
    %39 = arith.addf %25, %34 : vector<1x128xf32>
    %40 = arith.addf %26, %38 : vector<1x128xf32>
    %cst_12 = arith.constant -0.806451618 : f32
    %41 = vector.broadcast %cst_12 : f32 to vector<16x128xf32>
    %42 = arith.subf %0, %41 : vector<16x128xf32>
    %43 = arith.mulf %42, %42 : vector<16x128xf32>
    %cst_13 = arith.constant -5.000000e+03 : f32
    %44 = vector.broadcast %cst_13 : f32 to vector<16x128xf32>
    %45 = arith.mulf %43, %44 : vector<16x128xf32>
    %46 = math.exp %45 : vector<16x128xf32>
    %cst_14 = arith.constant dense<0.000000e+00> : vector<128xf32>
    %47 = vector.multi_reduction <add>, %46, %cst_14 [0] : vector<16x128xf32> to vector<128xf32>
    %48 = vector.shape_cast %47 : vector<128xf32> to vector<1x128xf32>
    %cst_15 = arith.constant 1.200000e-38 : f32
    %49 = vector.broadcast %cst_15 : f32 to vector<1x128xf32>
    %50 = arith.maximumf %48, %49 : vector<1x128xf32>
    %51 = math.log %50 : vector<1x128xf32>
    %52 = arith.mulf %48, %51 : vector<1x128xf32>
    %53 = arith.addf %39, %48 : vector<1x128xf32>
    %54 = arith.addf %40, %52 : vector<1x128xf32>
    %cst_16 = arith.constant -0.741935492 : f32
    %55 = vector.broadcast %cst_16 : f32 to vector<16x128xf32>
    %56 = arith.subf %0, %55 : vector<16x128xf32>
    %57 = arith.mulf %56, %56 : vector<16x128xf32>
    %cst_17 = arith.constant -5.000000e+03 : f32
    %58 = vector.broadcast %cst_17 : f32 to vector<16x128xf32>
    %59 = arith.mulf %57, %58 : vector<16x128xf32>
    %60 = math.exp %59 : vector<16x128xf32>
    %cst_18 = arith.constant dense<0.000000e+00> : vector<128xf32>
    %61 = vector.multi_reduction <add>, %60, %cst_18 [0] : vector<16x128xf32> to vector<128xf32>
    %62 = vector.shape_cast %61 : vector<128xf32> to vector<1x128xf32>
    %cst_19 = arith.constant 1.200000e-38 : f32
    %63 = vector.broadcast %cst_19 : f32 to vector<1x128xf32>
    %64 = arith.maximumf %62, %63 : vector<1x128xf32>
    %65 = math.log %64 : vector<1x128xf32>
    %66 = arith.mulf %62, %65 : vector<1x128xf32>
    %67 = arith.addf %53, %62 : vector<1x128xf32>
    %68 = arith.addf %54, %66 : vector<1x128xf32>
    %cst_20 = arith.constant -0.677419364 : f32
    %69 = vector.broadcast %cst_20 : f32 to vector<16x128xf32>
    %70 = arith.subf %0, %69 : vector<16x128xf32>
    %71 = arith.mulf %70, %70 : vector<16x128xf32>
    %cst_21 = arith.constant -5.000000e+03 : f32
    %72 = vector.broadcast %cst_21 : f32 to vector<16x128xf32>
    %73 = arith.mulf %71, %72 : vector<16x128xf32>
    %74 = math.exp %73 : vector<16x128xf32>
    %cst_22 = arith.constant dense<0.000000e+00> : vector<128xf32>
    %75 = vector.multi_reduction <add>, %74, %cst_22 [0] : vector<16x128xf32> to vector<128xf32>
    %76 = vector.shape_cast %75 : vector<128xf32> to vector<1x128xf32>
    %cst_23 = arith.constant 1.200000e-38 : f32
    %77 = vector.broadcast %cst_23 : f32 to vector<1x128xf32>
    %78 = arith.maximumf %76, %77 : vector<1x128xf32>
    %79 = math.log %78 : vector<1x128xf32>
    %80 = arith.mulf %76, %79 : vector<1x128xf32>
    %81 = arith.addf %67, %76 : vector<1x128xf32>
    %82 = arith.addf %68, %80 : vector<1x128xf32>
    %cst_24 = arith.constant -0.612903237 : f32
    %83 = vector.broadcast %cst_24 : f32 to vector<16x128xf32>
    %84 = arith.subf %0, %83 : vector<16x128xf32>
    %85 = arith.mulf %84, %84 : vector<16x128xf32>
    %cst_25 = arith.constant -5.000000e+03 : f32
    %86 = vector.broadcast %cst_25 : f32 to vector<16x128xf32>
    %87 = arith.mulf %85, %86 : vector<16x128xf32>
    %88 = math.exp %87 : vector<16x128xf32>
    %cst_26 = arith.constant dense<0.000000e+00> : vector<128xf32>
    %89 = vector.multi_reduction <add>, %88, %cst_26 [0] : vector<16x128xf32> to vector<128xf32>
    %90 = vector.shape_cast %89 : vector<128xf32> to vector<1x128xf32>
    %cst_27 = arith.constant 1.200000e-38 : f32
    %91 = vector.broadcast %cst_27 : f32 to vector<1x128xf32>
    %92 = arith.maximumf %90, %91 : vector<1x128xf32>
    %93 = math.log %92 : vector<1x128xf32>
    %94 = arith.mulf %90, %93 : vector<1x128xf32>
    %95 = arith.addf %81, %90 : vector<1x128xf32>
    %96 = arith.addf %82, %94 : vector<1x128xf32>
    %cst_28 = arith.constant -0.54838711 : f32
    %97 = vector.broadcast %cst_28 : f32 to vector<16x128xf32>
    %98 = arith.subf %0, %97 : vector<16x128xf32>
    %99 = arith.mulf %98, %98 : vector<16x128xf32>
    %cst_29 = arith.constant -5.000000e+03 : f32
    %100 = vector.broadcast %cst_29 : f32 to vector<16x128xf32>
    %101 = arith.mulf %99, %100 : vector<16x128xf32>
    %102 = math.exp %101 : vector<16x128xf32>
    %cst_30 = arith.constant dense<0.000000e+00> : vector<128xf32>
    %103 = vector.multi_reduction <add>, %102, %cst_30 [0] : vector<16x128xf32> to vector<128xf32>
    %104 = vector.shape_cast %103 : vector<128xf32> to vector<1x128xf32>
    %cst_31 = arith.constant 1.200000e-38 : f32
    %105 = vector.broadcast %cst_31 : f32 to vector<1x128xf32>
    %106 = arith.maximumf %104, %105 : vector<1x128xf32>
    %107 = math.log %106 : vector<1x128xf32>
    %108 = arith.mulf %104, %107 : vector<1x128xf32>
    %109 = arith.addf %95, %104 : vector<1x128xf32>
    %110 = arith.addf %96, %108 : vector<1x128xf32>
    %cst_32 = arith.constant -0.483870953 : f32
    %111 = vector.broadcast %cst_32 : f32 to vector<16x128xf32>
    %112 = arith.subf %0, %111 : vector<16x128xf32>
    %113 = arith.mulf %112, %112 : vector<16x128xf32>
    %cst_33 = arith.constant -5.000000e+03 : f32
    %114 = vector.broadcast %cst_33 : f32 to vector<16x128xf32>
    %115 = arith.mulf %113, %114 : vector<16x128xf32>
    %116 = math.exp %115 : vector<16x128xf32>
    %cst_34 = arith.constant dense<0.000000e+00> : vector<128xf32>
    %117 = vector.multi_reduction <add>, %116, %cst_34 [0] : vector<16x128xf32> to vector<128xf32>
    %118 = vector.shape_cast %117 : vector<128xf32> to vector<1x128xf32>
    %cst_35 = arith.constant 1.200000e-38 : f32
    %119 = vector.broadcast %cst_35 : f32 to vector<1x128xf32>
    %120 = arith.maximumf %118, %119 : vector<1x128xf32>
    %121 = math.log %120 : vector<1x128xf32>
    %122 = arith.mulf %118, %121 : vector<1x128xf32>
    %123 = arith.addf %109, %118 : vector<1x128xf32>
    %124 = arith.addf %110, %122 : vector<1x128xf32>
    %cst_36 = arith.constant -0.419354826 : f32
    %125 = vector.broadcast %cst_36 : f32 to vector<16x128xf32>
    %126 = arith.subf %0, %125 : vector<16x128xf32>
    %127 = arith.mulf %126, %126 : vector<16x128xf32>
    %cst_37 = arith.constant -5.000000e+03 : f32
    %128 = vector.broadcast %cst_37 : f32 to vector<16x128xf32>
    %129 = arith.mulf %127, %128 : vector<16x128xf32>
    %130 = math.exp %129 : vector<16x128xf32>
    %cst_38 = arith.constant dense<0.000000e+00> : vector<128xf32>
    %131 = vector.multi_reduction <add>, %130, %cst_38 [0] : vector<16x128xf32> to vector<128xf32>
    %132 = vector.shape_cast %131 : vector<128xf32> to vector<1x128xf32>
    %cst_39 = arith.constant 1.200000e-38 : f32
    %133 = vector.broadcast %cst_39 : f32 to vector<1x128xf32>
    %134 = arith.maximumf %132, %133 : vector<1x128xf32>
    %135 = math.log %134 : vector<1x128xf32>
    %136 = arith.mulf %132, %135 : vector<1x128xf32>
    %137 = arith.addf %123, %132 : vector<1x128xf32>
    %138 = arith.addf %124, %136 : vector<1x128xf32>
    %cst_40 = arith.constant -0.354838699 : f32
    %139 = vector.broadcast %cst_40 : f32 to vector<16x128xf32>
    %140 = arith.subf %0, %139 : vector<16x128xf32>
    %141 = arith.mulf %140, %140 : vector<16x128xf32>
    %cst_41 = arith.constant -5.000000e+03 : f32
    %142 = vector.broadcast %cst_41 : f32 to vector<16x128xf32>
    %143 = arith.mulf %141, %142 : vector<16x128xf32>
    %144 = math.exp %143 : vector<16x128xf32>
    %cst_42 = arith.constant dense<0.000000e+00> : vector<128xf32>
    %145 = vector.multi_reduction <add>, %144, %cst_42 [0] : vector<16x128xf32> to vector<128xf32>
    %146 = vector.shape_cast %145 : vector<128xf32> to vector<1x128xf32>
    %cst_43 = arith.constant 1.200000e-38 : f32
    %147 = vector.broadcast %cst_43 : f32 to vector<1x128xf32>
    %148 = arith.maximumf %146, %147 : vector<1x128xf32>
    %149 = math.log %148 : vector<1x128xf32>
    %150 = arith.mulf %146, %149 : vector<1x128xf32>
    %151 = arith.addf %137, %146 : vector<1x128xf32>
    %152 = arith.addf %138, %150 : vector<1x128xf32>
    %cst_44 = arith.constant -0.290322572 : f32
    %153 = vector.broadcast %cst_44 : f32 to vector<16x128xf32>
    %154 = arith.subf %0, %153 : vector<16x128xf32>
    %155 = arith.mulf %154, %154 : vector<16x128xf32>
    %cst_45 = arith.constant -5.000000e+03 : f32
    %156 = vector.broadcast %cst_45 : f32 to vector<16x128xf32>
    %157 = arith.mulf %155, %156 : vector<16x128xf32>
    %158 = math.exp %157 : vector<16x128xf32>
    %cst_46 = arith.constant dense<0.000000e+00> : vector<128xf32>
    %159 = vector.multi_reduction <add>, %158, %cst_46 [0] : vector<16x128xf32> to vector<128xf32>
    %160 = vector.shape_cast %159 : vector<128xf32> to vector<1x128xf32>
    %cst_47 = arith.constant 1.200000e-38 : f32
    %161 = vector.broadcast %cst_47 : f32 to vector<1x128xf32>
    %162 = arith.maximumf %160, %161 : vector<1x128xf32>
    %163 = math.log %162 : vector<1x128xf32>
    %164 = arith.mulf %160, %163 : vector<1x128xf32>
    %165 = arith.addf %151, %160 : vector<1x128xf32>
    %166 = arith.addf %152, %164 : vector<1x128xf32>
    %cst_48 = arith.constant -0.225806445 : f32
    %167 = vector.broadcast %cst_48 : f32 to vector<16x128xf32>
    %168 = arith.subf %0, %167 : vector<16x128xf32>
    %169 = arith.mulf %168, %168 : vector<16x128xf32>
    %cst_49 = arith.constant -5.000000e+03 : f32
    %170 = vector.broadcast %cst_49 : f32 to vector<16x128xf32>
    %171 = arith.mulf %169, %170 : vector<16x128xf32>
    %172 = math.exp %171 : vector<16x128xf32>
    %cst_50 = arith.constant dense<0.000000e+00> : vector<128xf32>
    %173 = vector.multi_reduction <add>, %172, %cst_50 [0] : vector<16x128xf32> to vector<128xf32>
    %174 = vector.shape_cast %173 : vector<128xf32> to vector<1x128xf32>
    %cst_51 = arith.constant 1.200000e-38 : f32
    %175 = vector.broadcast %cst_51 : f32 to vector<1x128xf32>
    %176 = arith.maximumf %174, %175 : vector<1x128xf32>
    %177 = math.log %176 : vector<1x128xf32>
    %178 = arith.mulf %174, %177 : vector<1x128xf32>
    %179 = arith.addf %165, %174 : vector<1x128xf32>
    %180 = arith.addf %166, %178 : vector<1x128xf32>
    %cst_52 = arith.constant -0.161290318 : f32
    %181 = vector.broadcast %cst_52 : f32 to vector<16x128xf32>
    %182 = arith.subf %0, %181 : vector<16x128xf32>
    %183 = arith.mulf %182, %182 : vector<16x128xf32>
    %cst_53 = arith.constant -5.000000e+03 : f32
    %184 = vector.broadcast %cst_53 : f32 to vector<16x128xf32>
    %185 = arith.mulf %183, %184 : vector<16x128xf32>
    %186 = math.exp %185 : vector<16x128xf32>
    %cst_54 = arith.constant dense<0.000000e+00> : vector<128xf32>
    %187 = vector.multi_reduction <add>, %186, %cst_54 [0] : vector<16x128xf32> to vector<128xf32>
    %188 = vector.shape_cast %187 : vector<128xf32> to vector<1x128xf32>
    %cst_55 = arith.constant 1.200000e-38 : f32
    %189 = vector.broadcast %cst_55 : f32 to vector<1x128xf32>
    %190 = arith.maximumf %188, %189 : vector<1x128xf32>
    %191 = math.log %190 : vector<1x128xf32>
    %192 = arith.mulf %188, %191 : vector<1x128xf32>
    %193 = arith.addf %179, %188 : vector<1x128xf32>
    %194 = arith.addf %180, %192 : vector<1x128xf32>
    %cst_56 = arith.constant -0.0967741906 : f32
    %195 = vector.broadcast %cst_56 : f32 to vector<16x128xf32>
    %196 = arith.subf %0, %195 : vector<16x128xf32>
    %197 = arith.mulf %196, %196 : vector<16x128xf32>
    %cst_57 = arith.constant -5.000000e+03 : f32
    %198 = vector.broadcast %cst_57 : f32 to vector<16x128xf32>
    %199 = arith.mulf %197, %198 : vector<16x128xf32>
    %200 = math.exp %199 : vector<16x128xf32>
    %cst_58 = arith.constant dense<0.000000e+00> : vector<128xf32>
    %201 = vector.multi_reduction <add>, %200, %cst_58 [0] : vector<16x128xf32> to vector<128xf32>
    %202 = vector.shape_cast %201 : vector<128xf32> to vector<1x128xf32>
    %cst_59 = arith.constant 1.200000e-38 : f32
    %203 = vector.broadcast %cst_59 : f32 to vector<1x128xf32>
    %204 = arith.maximumf %202, %203 : vector<1x128xf32>
    %205 = math.log %204 : vector<1x128xf32>
    %206 = arith.mulf %202, %205 : vector<1x128xf32>
    %207 = arith.addf %193, %202 : vector<1x128xf32>
    %208 = arith.addf %194, %206 : vector<1x128xf32>
    %cst_60 = arith.constant -0.0322580636 : f32
    %209 = vector.broadcast %cst_60 : f32 to vector<16x128xf32>
    %210 = arith.subf %0, %209 : vector<16x128xf32>
    %211 = arith.mulf %210, %210 : vector<16x128xf32>
    %cst_61 = arith.constant -5.000000e+03 : f32
    %212 = vector.broadcast %cst_61 : f32 to vector<16x128xf32>
    %213 = arith.mulf %211, %212 : vector<16x128xf32>
    %214 = math.exp %213 : vector<16x128xf32>
    %cst_62 = arith.constant dense<0.000000e+00> : vector<128xf32>
    %215 = vector.multi_reduction <add>, %214, %cst_62 [0] : vector<16x128xf32> to vector<128xf32>
    %216 = vector.shape_cast %215 : vector<128xf32> to vector<1x128xf32>
    %cst_63 = arith.constant 1.200000e-38 : f32
    %217 = vector.broadcast %cst_63 : f32 to vector<1x128xf32>
    %218 = arith.maximumf %216, %217 : vector<1x128xf32>
    %219 = math.log %218 : vector<1x128xf32>
    %220 = arith.mulf %216, %219 : vector<1x128xf32>
    %221 = arith.addf %207, %216 : vector<1x128xf32>
    %222 = arith.addf %208, %220 : vector<1x128xf32>
    %cst_64 = arith.constant 0.0322580636 : f32
    %223 = vector.broadcast %cst_64 : f32 to vector<16x128xf32>
    %224 = arith.subf %0, %223 : vector<16x128xf32>
    %225 = arith.mulf %224, %224 : vector<16x128xf32>
    %cst_65 = arith.constant -5.000000e+03 : f32
    %226 = vector.broadcast %cst_65 : f32 to vector<16x128xf32>
    %227 = arith.mulf %225, %226 : vector<16x128xf32>
    %228 = math.exp %227 : vector<16x128xf32>
    %cst_66 = arith.constant dense<0.000000e+00> : vector<128xf32>
    %229 = vector.multi_reduction <add>, %228, %cst_66 [0] : vector<16x128xf32> to vector<128xf32>
    %230 = vector.shape_cast %229 : vector<128xf32> to vector<1x128xf32>
    %cst_67 = arith.constant 1.200000e-38 : f32
    %231 = vector.broadcast %cst_67 : f32 to vector<1x128xf32>
    %232 = arith.maximumf %230, %231 : vector<1x128xf32>
    %233 = math.log %232 : vector<1x128xf32>
    %234 = arith.mulf %230, %233 : vector<1x128xf32>
    %235 = arith.addf %221, %230 : vector<1x128xf32>
    %236 = arith.addf %222, %234 : vector<1x128xf32>
    %cst_68 = arith.constant 0.0967741906 : f32
    %237 = vector.broadcast %cst_68 : f32 to vector<16x128xf32>
    %238 = arith.subf %0, %237 : vector<16x128xf32>
    %239 = arith.mulf %238, %238 : vector<16x128xf32>
    %cst_69 = arith.constant -5.000000e+03 : f32
    %240 = vector.broadcast %cst_69 : f32 to vector<16x128xf32>
    %241 = arith.mulf %239, %240 : vector<16x128xf32>
    %242 = math.exp %241 : vector<16x128xf32>
    %cst_70 = arith.constant dense<0.000000e+00> : vector<128xf32>
    %243 = vector.multi_reduction <add>, %242, %cst_70 [0] : vector<16x128xf32> to vector<128xf32>
    %244 = vector.shape_cast %243 : vector<128xf32> to vector<1x128xf32>
    %cst_71 = arith.constant 1.200000e-38 : f32
    %245 = vector.broadcast %cst_71 : f32 to vector<1x128xf32>
    %246 = arith.maximumf %244, %245 : vector<1x128xf32>
    %247 = math.log %246 : vector<1x128xf32>
    %248 = arith.mulf %244, %247 : vector<1x128xf32>
    %249 = arith.addf %235, %244 : vector<1x128xf32>
    %250 = arith.addf %236, %248 : vector<1x128xf32>
    %cst_72 = arith.constant 0.161290318 : f32
    %251 = vector.broadcast %cst_72 : f32 to vector<16x128xf32>
    %252 = arith.subf %0, %251 : vector<16x128xf32>
    %253 = arith.mulf %252, %252 : vector<16x128xf32>
    %cst_73 = arith.constant -5.000000e+03 : f32
    %254 = vector.broadcast %cst_73 : f32 to vector<16x128xf32>
    %255 = arith.mulf %253, %254 : vector<16x128xf32>
    %256 = math.exp %255 : vector<16x128xf32>
    %cst_74 = arith.constant dense<0.000000e+00> : vector<128xf32>
    %257 = vector.multi_reduction <add>, %256, %cst_74 [0] : vector<16x128xf32> to vector<128xf32>
    %258 = vector.shape_cast %257 : vector<128xf32> to vector<1x128xf32>
    %cst_75 = arith.constant 1.200000e-38 : f32
    %259 = vector.broadcast %cst_75 : f32 to vector<1x128xf32>
    %260 = arith.maximumf %258, %259 : vector<1x128xf32>
    %261 = math.log %260 : vector<1x128xf32>
    %262 = arith.mulf %258, %261 : vector<1x128xf32>
    %263 = arith.addf %249, %258 : vector<1x128xf32>
    %264 = arith.addf %250, %262 : vector<1x128xf32>
    %cst_76 = arith.constant 0.225806445 : f32
    %265 = vector.broadcast %cst_76 : f32 to vector<16x128xf32>
    %266 = arith.subf %0, %265 : vector<16x128xf32>
    %267 = arith.mulf %266, %266 : vector<16x128xf32>
    %cst_77 = arith.constant -5.000000e+03 : f32
    %268 = vector.broadcast %cst_77 : f32 to vector<16x128xf32>
    %269 = arith.mulf %267, %268 : vector<16x128xf32>
    %270 = math.exp %269 : vector<16x128xf32>
    %cst_78 = arith.constant dense<0.000000e+00> : vector<128xf32>
    %271 = vector.multi_reduction <add>, %270, %cst_78 [0] : vector<16x128xf32> to vector<128xf32>
    %272 = vector.shape_cast %271 : vector<128xf32> to vector<1x128xf32>
    %cst_79 = arith.constant 1.200000e-38 : f32
    %273 = vector.broadcast %cst_79 : f32 to vector<1x128xf32>
    %274 = arith.maximumf %272, %273 : vector<1x128xf32>
    %275 = math.log %274 : vector<1x128xf32>
    %276 = arith.mulf %272, %275 : vector<1x128xf32>
    %277 = arith.addf %263, %272 : vector<1x128xf32>
    %278 = arith.addf %264, %276 : vector<1x128xf32>
    %cst_80 = arith.constant 0.290322572 : f32
    %279 = vector.broadcast %cst_80 : f32 to vector<16x128xf32>
    %280 = arith.subf %0, %279 : vector<16x128xf32>
    %281 = arith.mulf %280, %280 : vector<16x128xf32>
    %cst_81 = arith.constant -5.000000e+03 : f32
    %282 = vector.broadcast %cst_81 : f32 to vector<16x128xf32>
    %283 = arith.mulf %281, %282 : vector<16x128xf32>
    %284 = math.exp %283 : vector<16x128xf32>
    %cst_82 = arith.constant dense<0.000000e+00> : vector<128xf32>
    %285 = vector.multi_reduction <add>, %284, %cst_82 [0] : vector<16x128xf32> to vector<128xf32>
    %286 = vector.shape_cast %285 : vector<128xf32> to vector<1x128xf32>
    %cst_83 = arith.constant 1.200000e-38 : f32
    %287 = vector.broadcast %cst_83 : f32 to vector<1x128xf32>
    %288 = arith.maximumf %286, %287 : vector<1x128xf32>
    %289 = math.log %288 : vector<1x128xf32>
    %290 = arith.mulf %286, %289 : vector<1x128xf32>
    %291 = arith.addf %277, %286 : vector<1x128xf32>
    %292 = arith.addf %278, %290 : vector<1x128xf32>
    %cst_84 = arith.constant 0.354838699 : f32
    %293 = vector.broadcast %cst_84 : f32 to vector<16x128xf32>
    %294 = arith.subf %0, %293 : vector<16x128xf32>
    %295 = arith.mulf %294, %294 : vector<16x128xf32>
    %cst_85 = arith.constant -5.000000e+03 : f32
    %296 = vector.broadcast %cst_85 : f32 to vector<16x128xf32>
    %297 = arith.mulf %295, %296 : vector<16x128xf32>
    %298 = math.exp %297 : vector<16x128xf32>
    %cst_86 = arith.constant dense<0.000000e+00> : vector<128xf32>
    %299 = vector.multi_reduction <add>, %298, %cst_86 [0] : vector<16x128xf32> to vector<128xf32>
    %300 = vector.shape_cast %299 : vector<128xf32> to vector<1x128xf32>
    %cst_87 = arith.constant 1.200000e-38 : f32
    %301 = vector.broadcast %cst_87 : f32 to vector<1x128xf32>
    %302 = arith.maximumf %300, %301 : vector<1x128xf32>
    %303 = math.log %302 : vector<1x128xf32>
    %304 = arith.mulf %300, %303 : vector<1x128xf32>
    %305 = arith.addf %291, %300 : vector<1x128xf32>
    %306 = arith.addf %292, %304 : vector<1x128xf32>
    %cst_88 = arith.constant 0.419354826 : f32
    %307 = vector.broadcast %cst_88 : f32 to vector<16x128xf32>
    %308 = arith.subf %0, %307 : vector<16x128xf32>
    %309 = arith.mulf %308, %308 : vector<16x128xf32>
    %cst_89 = arith.constant -5.000000e+03 : f32
    %310 = vector.broadcast %cst_89 : f32 to vector<16x128xf32>
    %311 = arith.mulf %309, %310 : vector<16x128xf32>
    %312 = math.exp %311 : vector<16x128xf32>
    %cst_90 = arith.constant dense<0.000000e+00> : vector<128xf32>
    %313 = vector.multi_reduction <add>, %312, %cst_90 [0] : vector<16x128xf32> to vector<128xf32>
    %314 = vector.shape_cast %313 : vector<128xf32> to vector<1x128xf32>
    %cst_91 = arith.constant 1.200000e-38 : f32
    %315 = vector.broadcast %cst_91 : f32 to vector<1x128xf32>
    %316 = arith.maximumf %314, %315 : vector<1x128xf32>
    %317 = math.log %316 : vector<1x128xf32>
    %318 = arith.mulf %314, %317 : vector<1x128xf32>
    %319 = arith.addf %305, %314 : vector<1x128xf32>
    %320 = arith.addf %306, %318 : vector<1x128xf32>
    %cst_92 = arith.constant 0.483870953 : f32
    %321 = vector.broadcast %cst_92 : f32 to vector<16x128xf32>
    %322 = arith.subf %0, %321 : vector<16x128xf32>
    %323 = arith.mulf %322, %322 : vector<16x128xf32>
    %cst_93 = arith.constant -5.000000e+03 : f32
    %324 = vector.broadcast %cst_93 : f32 to vector<16x128xf32>
    %325 = arith.mulf %323, %324 : vector<16x128xf32>
    %326 = math.exp %325 : vector<16x128xf32>
    %cst_94 = arith.constant dense<0.000000e+00> : vector<128xf32>
    %327 = vector.multi_reduction <add>, %326, %cst_94 [0] : vector<16x128xf32> to vector<128xf32>
    %328 = vector.shape_cast %327 : vector<128xf32> to vector<1x128xf32>
    %cst_95 = arith.constant 1.200000e-38 : f32
    %329 = vector.broadcast %cst_95 : f32 to vector<1x128xf32>
    %330 = arith.maximumf %328, %329 : vector<1x128xf32>
    %331 = math.log %330 : vector<1x128xf32>
    %332 = arith.mulf %328, %331 : vector<1x128xf32>
    %333 = arith.addf %319, %328 : vector<1x128xf32>
    %334 = arith.addf %320, %332 : vector<1x128xf32>
    %cst_96 = arith.constant 0.54838711 : f32
    %335 = vector.broadcast %cst_96 : f32 to vector<16x128xf32>
    %336 = arith.subf %0, %335 : vector<16x128xf32>
    %337 = arith.mulf %336, %336 : vector<16x128xf32>
    %cst_97 = arith.constant -5.000000e+03 : f32
    %338 = vector.broadcast %cst_97 : f32 to vector<16x128xf32>
    %339 = arith.mulf %337, %338 : vector<16x128xf32>
    %340 = math.exp %339 : vector<16x128xf32>
    %cst_98 = arith.constant dense<0.000000e+00> : vector<128xf32>
    %341 = vector.multi_reduction <add>, %340, %cst_98 [0] : vector<16x128xf32> to vector<128xf32>
    %342 = vector.shape_cast %341 : vector<128xf32> to vector<1x128xf32>
    %cst_99 = arith.constant 1.200000e-38 : f32
    %343 = vector.broadcast %cst_99 : f32 to vector<1x128xf32>
    %344 = arith.maximumf %342, %343 : vector<1x128xf32>
    %345 = math.log %344 : vector<1x128xf32>
    %346 = arith.mulf %342, %345 : vector<1x128xf32>
    %347 = arith.addf %333, %342 : vector<1x128xf32>
    %348 = arith.addf %334, %346 : vector<1x128xf32>
    %cst_100 = arith.constant 0.612903237 : f32
    %349 = vector.broadcast %cst_100 : f32 to vector<16x128xf32>
    %350 = arith.subf %0, %349 : vector<16x128xf32>
    %351 = arith.mulf %350, %350 : vector<16x128xf32>
    %cst_101 = arith.constant -5.000000e+03 : f32
    %352 = vector.broadcast %cst_101 : f32 to vector<16x128xf32>
    %353 = arith.mulf %351, %352 : vector<16x128xf32>
    %354 = math.exp %353 : vector<16x128xf32>
    %cst_102 = arith.constant dense<0.000000e+00> : vector<128xf32>
    %355 = vector.multi_reduction <add>, %354, %cst_102 [0] : vector<16x128xf32> to vector<128xf32>
    %356 = vector.shape_cast %355 : vector<128xf32> to vector<1x128xf32>
    %cst_103 = arith.constant 1.200000e-38 : f32
    %357 = vector.broadcast %cst_103 : f32 to vector<1x128xf32>
    %358 = arith.maximumf %356, %357 : vector<1x128xf32>
    %359 = math.log %358 : vector<1x128xf32>
    %360 = arith.mulf %356, %359 : vector<1x128xf32>
    %361 = arith.addf %347, %356 : vector<1x128xf32>
    %362 = arith.addf %348, %360 : vector<1x128xf32>
    %cst_104 = arith.constant 0.677419364 : f32
    %363 = vector.broadcast %cst_104 : f32 to vector<16x128xf32>
    %364 = arith.subf %0, %363 : vector<16x128xf32>
    %365 = arith.mulf %364, %364 : vector<16x128xf32>
    %cst_105 = arith.constant -5.000000e+03 : f32
    %366 = vector.broadcast %cst_105 : f32 to vector<16x128xf32>
    %367 = arith.mulf %365, %366 : vector<16x128xf32>
    %368 = math.exp %367 : vector<16x128xf32>
    %cst_106 = arith.constant dense<0.000000e+00> : vector<128xf32>
    %369 = vector.multi_reduction <add>, %368, %cst_106 [0] : vector<16x128xf32> to vector<128xf32>
    %370 = vector.shape_cast %369 : vector<128xf32> to vector<1x128xf32>
    %cst_107 = arith.constant 1.200000e-38 : f32
    %371 = vector.broadcast %cst_107 : f32 to vector<1x128xf32>
    %372 = arith.maximumf %370, %371 : vector<1x128xf32>
    %373 = math.log %372 : vector<1x128xf32>
    %374 = arith.mulf %370, %373 : vector<1x128xf32>
    %375 = arith.addf %361, %370 : vector<1x128xf32>
    %376 = arith.addf %362, %374 : vector<1x128xf32>
    %cst_108 = arith.constant 0.741935492 : f32
    %377 = vector.broadcast %cst_108 : f32 to vector<16x128xf32>
    %378 = arith.subf %0, %377 : vector<16x128xf32>
    %379 = arith.mulf %378, %378 : vector<16x128xf32>
    %cst_109 = arith.constant -5.000000e+03 : f32
    %380 = vector.broadcast %cst_109 : f32 to vector<16x128xf32>
    %381 = arith.mulf %379, %380 : vector<16x128xf32>
    %382 = math.exp %381 : vector<16x128xf32>
    %cst_110 = arith.constant dense<0.000000e+00> : vector<128xf32>
    %383 = vector.multi_reduction <add>, %382, %cst_110 [0] : vector<16x128xf32> to vector<128xf32>
    %384 = vector.shape_cast %383 : vector<128xf32> to vector<1x128xf32>
    %cst_111 = arith.constant 1.200000e-38 : f32
    %385 = vector.broadcast %cst_111 : f32 to vector<1x128xf32>
    %386 = arith.maximumf %384, %385 : vector<1x128xf32>
    %387 = math.log %386 : vector<1x128xf32>
    %388 = arith.mulf %384, %387 : vector<1x128xf32>
    %389 = arith.addf %375, %384 : vector<1x128xf32>
    %390 = arith.addf %376, %388 : vector<1x128xf32>
    %cst_112 = arith.constant 0.806451618 : f32
    %391 = vector.broadcast %cst_112 : f32 to vector<16x128xf32>
    %392 = arith.subf %0, %391 : vector<16x128xf32>
    %393 = arith.mulf %392, %392 : vector<16x128xf32>
    %cst_113 = arith.constant -5.000000e+03 : f32
    %394 = vector.broadcast %cst_113 : f32 to vector<16x128xf32>
    %395 = arith.mulf %393, %394 : vector<16x128xf32>
    %396 = math.exp %395 : vector<16x128xf32>
    %cst_114 = arith.constant dense<0.000000e+00> : vector<128xf32>
    %397 = vector.multi_reduction <add>, %396, %cst_114 [0] : vector<16x128xf32> to vector<128xf32>
    %398 = vector.shape_cast %397 : vector<128xf32> to vector<1x128xf32>
    %cst_115 = arith.constant 1.200000e-38 : f32
    %399 = vector.broadcast %cst_115 : f32 to vector<1x128xf32>
    %400 = arith.maximumf %398, %399 : vector<1x128xf32>
    %401 = math.log %400 : vector<1x128xf32>
    %402 = arith.mulf %398, %401 : vector<1x128xf32>
    %403 = arith.addf %389, %398 : vector<1x128xf32>
    %404 = arith.addf %390, %402 : vector<1x128xf32>
    %cst_116 = arith.constant 0.870967745 : f32
    %405 = vector.broadcast %cst_116 : f32 to vector<16x128xf32>
    %406 = arith.subf %0, %405 : vector<16x128xf32>
    %407 = arith.mulf %406, %406 : vector<16x128xf32>
    %cst_117 = arith.constant -5.000000e+03 : f32
    %408 = vector.broadcast %cst_117 : f32 to vector<16x128xf32>
    %409 = arith.mulf %407, %408 : vector<16x128xf32>
    %410 = math.exp %409 : vector<16x128xf32>
    %cst_118 = arith.constant dense<0.000000e+00> : vector<128xf32>
    %411 = vector.multi_reduction <add>, %410, %cst_118 [0] : vector<16x128xf32> to vector<128xf32>
    %412 = vector.shape_cast %411 : vector<128xf32> to vector<1x128xf32>
    %cst_119 = arith.constant 1.200000e-38 : f32
    %413 = vector.broadcast %cst_119 : f32 to vector<1x128xf32>
    %414 = arith.maximumf %412, %413 : vector<1x128xf32>
    %415 = math.log %414 : vector<1x128xf32>
    %416 = arith.mulf %412, %415 : vector<1x128xf32>
    %417 = arith.addf %403, %412 : vector<1x128xf32>
    %418 = arith.addf %404, %416 : vector<1x128xf32>
    %cst_120 = arith.constant 0.935483872 : f32
    %419 = vector.broadcast %cst_120 : f32 to vector<16x128xf32>
    %420 = arith.subf %0, %419 : vector<16x128xf32>
    %421 = arith.mulf %420, %420 : vector<16x128xf32>
    %cst_121 = arith.constant -5.000000e+03 : f32
    %422 = vector.broadcast %cst_121 : f32 to vector<16x128xf32>
    %423 = arith.mulf %421, %422 : vector<16x128xf32>
    %424 = math.exp %423 : vector<16x128xf32>
    %cst_122 = arith.constant dense<0.000000e+00> : vector<128xf32>
    %425 = vector.multi_reduction <add>, %424, %cst_122 [0] : vector<16x128xf32> to vector<128xf32>
    %426 = vector.shape_cast %425 : vector<128xf32> to vector<1x128xf32>
    %cst_123 = arith.constant 1.200000e-38 : f32
    %427 = vector.broadcast %cst_123 : f32 to vector<1x128xf32>
    %428 = arith.maximumf %426, %427 : vector<1x128xf32>
    %429 = math.log %428 : vector<1x128xf32>
    %430 = arith.mulf %426, %429 : vector<1x128xf32>
    %431 = arith.addf %417, %426 : vector<1x128xf32>
    %432 = arith.addf %418, %430 : vector<1x128xf32>
    %cst_124 = arith.constant 1.000000e+00 : f32
    %433 = vector.broadcast %cst_124 : f32 to vector<16x128xf32>
    %434 = arith.subf %0, %433 : vector<16x128xf32>
    %435 = arith.mulf %434, %434 : vector<16x128xf32>
    %cst_125 = arith.constant -5.000000e+03 : f32
    %436 = vector.broadcast %cst_125 : f32 to vector<16x128xf32>
    %437 = arith.mulf %435, %436 : vector<16x128xf32>
    %438 = math.exp %437 : vector<16x128xf32>
    %cst_126 = arith.constant dense<0.000000e+00> : vector<128xf32>
    %439 = vector.multi_reduction <add>, %438, %cst_126 [0] : vector<16x128xf32> to vector<128xf32>
    %440 = vector.shape_cast %439 : vector<128xf32> to vector<1x128xf32>
    %cst_127 = arith.constant 1.200000e-38 : f32
    %441 = vector.broadcast %cst_127 : f32 to vector<1x128xf32>
    %442 = arith.maximumf %440, %441 : vector<1x128xf32>
    %443 = math.log %442 : vector<1x128xf32>
    %444 = arith.mulf %440, %443 : vector<1x128xf32>
    %445 = arith.addf %431, %440 : vector<1x128xf32>
    %446 = arith.addf %432, %444 : vector<1x128xf32>
    %cst_128 = arith.constant 1.200000e-38 : f32
    %447 = vector.broadcast %cst_128 : f32 to vector<1x128xf32>
    %448 = arith.maximumf %445, %447 : vector<1x128xf32>
    %449 = math.log %448 : vector<1x128xf32>
    %450 = arith.divf %446, %448 : vector<1x128xf32>
    %451 = arith.subf %449, %450 : vector<1x128xf32>
    %cst_129 = arith.constant 0.000000e+00 : f32
    %452 = vector.broadcast %cst_129 : f32 to vector<1x128xf32>
    %453 = arith.cmpf ogt, %445, %452 : vector<1x128xf32>
    %cst_130 = arith.constant 0.000000e+00 : f32
    %454 = vector.broadcast %cst_130 : f32 to vector<1x128xf32>
    %455 = arith.select %453, %451, %454 : vector<1x128xi1>, vector<1x128xf32>
    %c0_131 = arith.constant 0 : index
    %c0_132 = arith.constant 0 : index
    %456 = vector.load %arg2[%c0_131, %c0_132] : memref<1x128xf32, #tpu.memory_space<vmem>>, vector<1x128xf32>
    tpu.vector_store %arg2[%c0_131, %c0_132], %455 {strides = array<i32>} : memref<1x128xf32, #tpu.memory_space<vmem>>, vector<1x128xf32>,
    return
  }
  func.func @transform_0(%arg0: i32) -> (i32, i32) {
    %c0_i32 = arith.constant 0 : i32
    %c0_i32_0 = arith.constant 0 : i32
    return %c0_i32, %arg0 : i32, i32
  }
  func.func @transform_1(%arg0: i32) -> (i32, i32) {
    %c0_i32 = arith.constant 0 : i32
    %c0_i32_0 = arith.constant 0 : i32
    return %c0_i32, %arg0 : i32, i32
  }
}

</mosaic_0001>

<llo_original>
// kernel: tpu_custom_call.1
$region0: #{tpu_custom_call.1}
  #allocation0 [shape = 'u32[]', space=smem, size = 0x4, offset = 0x4, fixed_abs, tag = 'smem constant byte address 0x4 - core index']
  #allocation1 [shape = 'u32[144,128]{1,0:T(1,128)}', space=vmem, size = 0x12000, scoped, tag = 'internal scratch']
  %s0 = inlined_call_operand.hbm [shape: f32[16,128], index: 0, kind: input, shape index: {}]
  %s1 = inlined_call_operand.hbm [shape: f32[1,128], index: 1, kind: output, shape index: {}]
  %s2 = sld [smem:[#allocation0]]
  $region18: #{tpu_custom_call.1} parent=0
    _
  %s4 = ssub.s32 1, %s2
  %s5 = scalar_select 0, %s4, %s2
  $region1: #{tpu_custom_call.1} parent=0
    #allocation2 [shape = 'u8[8192]{0}', space=vmem, size = 0x2000, scoped, tag = 'input window, operand 0, single buffered']
    #allocation3 [shape = 's32[1]{0}', space=sflag, size = 0x4, scoped, tag = 'scoped memory for tpu_custom_call.1']
    #allocation4 [shape = 's32[1]{0}', space=sflag, size = 0x4, scoped, tag = 'scoped memory for tpu_custom_call.1']
    #allocation5 [shape = 'u8[512]{0}', space=vmem, size = 0x400, scoped, tag = 'output window, operand 0, single buffered']
    %6 = vsyncpa [#allocation3], 0
    %7 = vsyncpa [#allocation4], 0
    // Predicated region
    $region2: #{tpu_custom_call.1} parent=1 // pred_check
      _
    $region3: #{tpu_custom_call.1} parent=1 // pred_check_branch
      %9 = sbr.rel (0) target = $region5
    $region4: #{tpu_custom_call.1} parent=1 // pred_region
      %s11 = ssub.s32 256, 256
      %12 = vsyncadd [#allocation3], %s11
      %s13 = sshll.u32 [#allocation2], 4
      %s14 = int_to_ptr.vmem [resolvable:$true] %s13
      %19 = dma.hbm_to_vmem [thread:$0]  %s0, 256, %s14, [#allocation3], 128, 128, 8
    $region5: #{tpu_custom_call.1} parent=1 // pred_fallthru
      _
    // Predicated region
    $region6: #{tpu_custom_call.1} parent=1 // pred_check
      _
    $region7: #{tpu_custom_call.1} parent=1 // pred_check_branch
      %21 = sbr.rel (0) target = $region9
    $region8: #{tpu_custom_call.1} parent=1 // pred_region
      %22 = dma.done [#allocation3], 256
    $region9: #{tpu_custom_call.1} parent=1 // pred_fallthru
      _
    %v23 = vld [vmem:[#allocation2] sm:$0xff]
    %v24 = vld [vmem:[#allocation2 + $0x8] sm:$0xff]
    %v25 = vsub.f32 %v23, -1.0
    %v26 = vsub.f32 %v24, -1.0
    %v27 = vmul.f32 %v25, %v25
    %v28 = vmul.f32 %v26, %v26
    %v29 = vmul.f32 %v27, -5000.0
    %v30 = vmul.f32 %v28, -5000.0
    %v31 = vmul.f32 %v29, 1.442695
    %v32 = vpow.pop %v31
    %v33 = vmul.f32 %v30, 1.442695
    %v34 = vpow.pop %v33
    %v35 = vadd.f32 %v32, %v34
    %v36 = vrot.slane %v35, 4
    %v37 = vadd.f32 %v35, %v36
    %v38 = vrot.slane %v37, 2
    %v39 = vadd.f32 %v37, %v38
    %v40 = vrot.slane %v39, 1
    %v41 = vadd.f32 %v39, %v40
    %v42 = vmax.f32 %v41, 1.2e-38
    %v43 = vlog2.pop %v42
    %v44 = vmul.f32 %v43, 0.6931472
    %v45 = vmul.f32 %v41, %v44
    %v46 = vsub.f32 %v23, -0.9354839
    %v47 = vsub.f32 %v24, -0.9354839
    %v48 = vmul.f32 %v46, %v46
    %v49 = vmul.f32 %v47, %v47
    %v50 = vmul.f32 %v48, -5000.0
    %v51 = vmul.f32 %v49, -5000.0
    %v52 = vmul.f32 %v50, 1.442695
    %v53 = vpow.pop %v52
    %v54 = vmul.f32 %v51, 1.442695
    %v55 = vpow.pop %v54
    %v56 = vadd.f32 %v53, %v55
    %v57 = vrot.slane %v56, 4
    %v58 = vadd.f32 %v56, %v57
    %v59 = vrot.slane %v58, 2
    %v60 = vadd.f32 %v58, %v59
    %v61 = vrot.slane %v60, 1
    %v62 = vadd.f32 %v60, %v61
    %v63 = vmax.f32 %v62, 1.2e-38
    %v64 = vlog2.pop %v63
    %v65 = vmul.f32 %v64, 0.6931472
    %v66 = vmul.f32 %v62, %v65
    %v67 = vadd.f32 %v41, %v62
    %v68 = vadd.f32 %v45, %v66
    %v69 = vsub.f32 %v23, -0.87096775
    %v70 = vsub.f32 %v24, -0.87096775
    %v71 = vmul.f32 %v69, %v69
    %v72 = vmul.f32 %v70, %v70
    %v73 = vmul.f32 %v71, -5000.0
    %v74 = vmul.f32 %v72, -5000.0
    %v75 = vmul.f32 %v73, 1.442695
    %v76 = vpow.pop %v75
    %v77 = vmul.f32 %v74, 1.442695
    %v78 = vpow.pop %v77
    %v79 = vadd.f32 %v76, %v78
    %v80 = vrot.slane %v79, 4
    %v81 = vadd.f32 %v79, %v80
    %v82 = vrot.slane %v81, 2
    %v83 = vadd.f32 %v81, %v82
    %v84 = vrot.slane %v83, 1
    %v85 = vadd.f32 %v83, %v84
    %v86 = vmax.f32 %v85, 1.2e-38
    %v87 = vlog2.pop %v86
    %v88 = vmul.f32 %v87, 0.6931472
    %v89 = vmul.f32 %v85, %v88
    %v90 = vadd.f32 %v67, %v85
    %v91 = vadd.f32 %v68, %v89
    %v92 = vsub.f32 %v23, -0.8064516
    %v93 = vsub.f32 %v24, -0.8064516
    %v94 = vmul.f32 %v92, %v92
    %v95 = vmul.f32 %v93, %v93
    %v96 = vmul.f32 %v94, -5000.0
    %v97 = vmul.f32 %v95, -5000.0
    %v98 = vmul.f32 %v96, 1.442695
    %v99 = vpow.pop %v98
    %v100 = vmul.f32 %v97, 1.442695
    %v101 = vpow.pop %v100
    %v102 = vadd.f32 %v99, %v101
    %v103 = vrot.slane %v102, 4
    %v104 = vadd.f32 %v102, %v103
    %v105 = vrot.slane %v104, 2
    %v106 = vadd.f32 %v104, %v105
    %v107 = vrot.slane %v106, 1
    %v108 = vadd.f32 %v106, %v107
    %v109 = vmax.f32 %v108, 1.2e-38
    %v110 = vlog2.pop %v109
    %v111 = vmul.f32 %v110, 0.6931472
    %v112 = vmul.f32 %v108, %v111
    %v113 = vadd.f32 %v90, %v108
    %v114 = vadd.f32 %v91, %v112
    %v115 = vsub.f32 %v23, -0.7419355
    %v116 = vsub.f32 %v24, -0.7419355
    %v117 = vmul.f32 %v115, %v115
    %v118 = vmul.f32 %v116, %v116
    %v119 = vmul.f32 %v117, -5000.0
    %v120 = vmul.f32 %v118, -5000.0
    %v121 = vmul.f32 %v119, 1.442695
    %v122 = vpow.pop %v121
    %v123 = vmul.f32 %v120, 1.442695
    %v124 = vpow.pop %v123
    %v125 = vadd.f32 %v122, %v124
    %v126 = vrot.slane %v125, 4
    %v127 = vadd.f32 %v125, %v126
    %v128 = vrot.slane %v127, 2
    %v129 = vadd.f32 %v127, %v128
    %v130 = vrot.slane %v129, 1
    %v131 = vadd.f32 %v129, %v130
    %v132 = vmax.f32 %v131, 1.2e-38
    %v133 = vlog2.pop %v132
    %v134 = vmul.f32 %v133, 0.6931472
    %v135 = vmul.f32 %v131, %v134
    %v136 = vadd.f32 %v113, %v131
    %v137 = vadd.f32 %v114, %v135
    %v138 = vsub.f32 %v23, -0.67741936
    %v139 = vsub.f32 %v24, -0.67741936
    %v140 = vmul.f32 %v138, %v138
    %v141 = vmul.f32 %v139, %v139
    %v142 = vmul.f32 %v140, -5000.0
    %v143 = vmul.f32 %v141, -5000.0
    %v144 = vmul.f32 %v142, 1.442695
    %v145 = vpow.pop %v144
    %v146 = vmul.f32 %v143, 1.442695
    %v147 = vpow.pop %v146
    %v148 = vadd.f32 %v145, %v147
    %v149 = vrot.slane %v148, 4
    %v150 = vadd.f32 %v148, %v149
    %v151 = vrot.slane %v150, 2
    %v152 = vadd.f32 %v150, %v151
    %v153 = vrot.slane %v152, 1
    %v154 = vadd.f32 %v152, %v153
    %v155 = vmax.f32 %v154, 1.2e-38
    %v156 = vlog2.pop %v155
    %v157 = vmul.f32 %v156, 0.6931472
    %v158 = vmul.f32 %v154, %v157
    %v159 = vadd.f32 %v136, %v154
    %v160 = vadd.f32 %v137, %v158
    %v161 = vsub.f32 %v23, -0.61290324
    %v162 = vsub.f32 %v24, -0.61290324
    %v163 = vmul.f32 %v161, %v161
    %v164 = vmul.f32 %v162, %v162
    %v165 = vmul.f32 %v163, -5000.0
    %v166 = vmul.f32 %v164, -5000.0
    %v167 = vmul.f32 %v165, 1.442695
    %v168 = vpow.pop %v167
    %v169 = vmul.f32 %v166, 1.442695
    %v170 = vpow.pop %v169
    %v171 = vadd.f32 %v168, %v170
    %v172 = vrot.slane %v171, 4
    %v173 = vadd.f32 %v171, %v172
    %v174 = vrot.slane %v173, 2
    %v175 = vadd.f32 %v173, %v174
    %v176 = vrot.slane %v175, 1
    %v177 = vadd.f32 %v175, %v176
    %v178 = vmax.f32 %v177, 1.2e-38
    %v179 = vlog2.pop %v178
    %v180 = vmul.f32 %v179, 0.6931472
    %v181 = vmul.f32 %v177, %v180
    %v182 = vadd.f32 %v159, %v177
    %v183 = vadd.f32 %v160, %v181
    %v184 = vsub.f32 %v23, -0.5483871
    %v185 = vsub.f32 %v24, -0.5483871
    %v186 = vmul.f32 %v184, %v184
    %v187 = vmul.f32 %v185, %v185
    %v188 = vmul.f32 %v186, -5000.0
    %v189 = vmul.f32 %v187, -5000.0
    %v190 = vmul.f32 %v188, 1.442695
    %v191 = vpow.pop %v190
    %v192 = vmul.f32 %v189, 1.442695
    %v193 = vpow.pop %v192
    %v194 = vadd.f32 %v191, %v193
    %v195 = vrot.slane %v194, 4
    %v196 = vadd.f32 %v194, %v195
    %v197 = vrot.slane %v196, 2
    %v198 = vadd.f32 %v196, %v197
    %v199 = vrot.slane %v198, 1
    %v200 = vadd.f32 %v198, %v199
    %v201 = vmax.f32 %v200, 1.2e-38
    %v202 = vlog2.pop %v201
    %v203 = vmul.f32 %v202, 0.6931472
    %v204 = vmul.f32 %v200, %v203
    %v205 = vadd.f32 %v182, %v200
    %v206 = vadd.f32 %v183, %v204
    %v207 = vsub.f32 %v23, -0.48387095
    %v208 = vsub.f32 %v24, -0.48387095
    %v209 = vmul.f32 %v207, %v207
    %v210 = vmul.f32 %v208, %v208
    %v211 = vmul.f32 %v209, -5000.0
    %v212 = vmul.f32 %v210, -5000.0
    %v213 = vmul.f32 %v211, 1.442695
    %v214 = vpow.pop %v213
    %v215 = vmul.f32 %v212, 1.442695
    %v216 = vpow.pop %v215
    %v217 = vadd.f32 %v214, %v216
    %v218 = vrot.slane %v217, 4
    %v219 = vadd.f32 %v217, %v218
    %v220 = vrot.slane %v219, 2
    %v221 = vadd.f32 %v219, %v220
    %v222 = vrot.slane %v221, 1
    %v223 = vadd.f32 %v221, %v222
    %v224 = vmax.f32 %v223, 1.2e-38
    %v225 = vlog2.pop %v224
    %v226 = vmul.f32 %v225, 0.6931472
    %v227 = vmul.f32 %v223, %v226
    %v228 = vadd.f32 %v205, %v223
    %v229 = vadd.f32 %v206, %v227
    %v230 = vsub.f32 %v23, -0.41935483
    %v231 = vsub.f32 %v24, -0.41935483
    %v232 = vmul.f32 %v230, %v230
    %v233 = vmul.f32 %v231, %v231
    %v234 = vmul.f32 %v232, -5000.0
    %v235 = vmul.f32 %v233, -5000.0
    %v236 = vmul.f32 %v234, 1.442695
    %v237 = vpow.pop %v236
    %v238 = vmul.f32 %v235, 1.442695
    %v239 = vpow.pop %v238
    %v240 = vadd.f32 %v237, %v239
    %v241 = vrot.slane %v240, 4
    %v242 = vadd.f32 %v240, %v241
    %v243 = vrot.slane %v242, 2
    %v244 = vadd.f32 %v242, %v243
    %v245 = vrot.slane %v244, 1
    %v246 = vadd.f32 %v244, %v245
    %v247 = vmax.f32 %v246, 1.2e-38
    %v248 = vlog2.pop %v247
    %v249 = vmul.f32 %v248, 0.6931472
    %v250 = vmul.f32 %v246, %v249
    %v251 = vadd.f32 %v228, %v246
    %v252 = vadd.f32 %v229, %v250
    %v253 = vsub.f32 %v23, -0.3548387
    %v254 = vsub.f32 %v24, -0.3548387
    %v255 = vmul.f32 %v253, %v253
    %v256 = vmul.f32 %v254, %v254
    %v257 = vmul.f32 %v255, -5000.0
    %v258 = vmul.f32 %v256, -5000.0
    %v259 = vmul.f32 %v257, 1.442695
    %v260 = vpow.pop %v259
    %v261 = vmul.f32 %v258, 1.442695
    %v262 = vpow.pop %v261
    %v263 = vadd.f32 %v260, %v262
    %v264 = vrot.slane %v263, 4
    %v265 = vadd.f32 %v263, %v264
    %v266 = vrot.slane %v265, 2
    %v267 = vadd.f32 %v265, %v266
    %v268 = vrot.slane %v267, 1
    %v269 = vadd.f32 %v267, %v268
    %v270 = vmax.f32 %v269, 1.2e-38
    %v271 = vlog2.pop %v270
    %v272 = vmul.f32 %v271, 0.6931472
    %v273 = vmul.f32 %v269, %v272
    %v274 = vadd.f32 %v251, %v269
    %v275 = vadd.f32 %v252, %v273
    %v276 = vsub.f32 %v23, -0.29032257
    %v277 = vsub.f32 %v24, -0.29032257
    %v278 = vmul.f32 %v276, %v276
    %v279 = vmul.f32 %v277, %v277
    %v280 = vmul.f32 %v278, -5000.0
    %v281 = vmul.f32 %v279, -5000.0
    %v282 = vmul.f32 %v280, 1.442695
    %v283 = vpow.pop %v282
    %v284 = vmul.f32 %v281, 1.442695
    %v285 = vpow.pop %v284
    %v286 = vadd.f32 %v283, %v285
    %v287 = vrot.slane %v286, 4
    %v288 = vadd.f32 %v286, %v287
    %v289 = vrot.slane %v288, 2
    %v290 = vadd.f32 %v288, %v289
    %v291 = vrot.slane %v290, 1
    %v292 = vadd.f32 %v290, %v291
    %v293 = vmax.f32 %v292, 1.2e-38
    %v294 = vlog2.pop %v293
    %v295 = vmul.f32 %v294, 0.6931472
    %v296 = vmul.f32 %v292, %v295
    %v297 = vadd.f32 %v274, %v292
    %v298 = vadd.f32 %v275, %v296
    %v299 = vsub.f32 %v23, -0.22580644
    %v300 = vsub.f32 %v24, -0.22580644
    %v301 = vmul.f32 %v299, %v299
    %v302 = vmul.f32 %v300, %v300
    %v303 = vmul.f32 %v301, -5000.0
    %v304 = vmul.f32 %v302, -5000.0
    %v305 = vmul.f32 %v303, 1.442695
    %v306 = vpow.pop %v305
    %v307 = vmul.f32 %v304, 1.442695
    %v308 = vpow.pop %v307
    %v309 = vadd.f32 %v306, %v308
    %v310 = vrot.slane %v309, 4
    %v311 = vadd.f32 %v309, %v310
    %v312 = vrot.slane %v311, 2
    %v313 = vadd.f32 %v311, %v312
    %v314 = vrot.slane %v313, 1
    %v315 = vadd.f32 %v313, %v314
    %v316 = vmax.f32 %v315, 1.2e-38
    %v317 = vlog2.pop %v316
    %v318 = vmul.f32 %v317, 0.6931472
    %v319 = vmul.f32 %v315, %v318
    %v320 = vadd.f32 %v297, %v315
    %v321 = vadd.f32 %v298, %v319
    %v322 = vsub.f32 %v23, -0.16129032
    %v323 = vsub.f32 %v24, -0.16129032
    %v324 = vmul.f32 %v322, %v322
    %v325 = vmul.f32 %v323, %v323
    %v326 = vmul.f32 %v324, -5000.0
    %v327 = vmul.f32 %v325, -5000.0
    %v328 = vmul.f32 %v326, 1.442695
    %v329 = vpow.pop %v328
    %v330 = vmul.f32 %v327, 1.442695
    %v331 = vpow.pop %v330
    %v332 = vadd.f32 %v329, %v331
    %v333 = vrot.slane %v332, 4
    %v334 = vadd.f32 %v332, %v333
    %v335 = vrot.slane %v334, 2
    %v336 = vadd.f32 %v334, %v335
    %v337 = vrot.slane %v336, 1
    %v338 = vadd.f32 %v336, %v337
    %v339 = vmax.f32 %v338, 1.2e-38
    %v340 = vlog2.pop %v339
    %v341 = vmul.f32 %v340, 0.6931472
    %v342 = vmul.f32 %v338, %v341
    %v343 = vadd.f32 %v320, %v338
    %v344 = vadd.f32 %v321, %v342
    %v345 = vsub.f32 %v23, -0.09677419
    %v346 = vsub.f32 %v24, -0.09677419
    %v347 = vmul.f32 %v345, %v345
    %v348 = vmul.f32 %v346, %v346
    %v349 = vmul.f32 %v347, -5000.0
    %v350 = vmul.f32 %v348, -5000.0
    %v351 = vmul.f32 %v349, 1.442695
    %v352 = vpow.pop %v351
    %v353 = vmul.f32 %v350, 1.442695
    %v354 = vpow.pop %v353
    %v355 = vadd.f32 %v352, %v354
    %v356 = vrot.slane %v355, 4
    %v357 = vadd.f32 %v355, %v356
    %v358 = vrot.slane %v357, 2
    %v359 = vadd.f32 %v357, %v358
    %v360 = vrot.slane %v359, 1
    %v361 = vadd.f32 %v359, %v360
    %v362 = vmax.f32 %v361, 1.2e-38
    %v363 = vlog2.pop %v362
    %v364 = vmul.f32 %v363, 0.6931472
    %v365 = vmul.f32 %v361, %v364
    %v366 = vadd.f32 %v343, %v361
    %v367 = vadd.f32 %v344, %v365
    %v368 = vsub.f32 %v23, -0.032258064
    %v369 = vsub.f32 %v24, -0.032258064
    %v370 = vmul.f32 %v368, %v368
    %v371 = vmul.f32 %v369, %v369
    %v372 = vmul.f32 %v370, -5000.0
    %v373 = vmul.f32 %v371, -5000.0
    %v374 = vmul.f32 %v372, 1.442695
    %v375 = vpow.pop %v374
    %v376 = vmul.f32 %v373, 1.442695
    %v377 = vpow.pop %v376
    %v378 = vadd.f32 %v375, %v377
    %v379 = vrot.slane %v378, 4
    %v380 = vadd.f32 %v378, %v379
    %v381 = vrot.slane %v380, 2
    %v382 = vadd.f32 %v380, %v381
    %v383 = vrot.slane %v382, 1
    %v384 = vadd.f32 %v382, %v383
    %v385 = vmax.f32 %v384, 1.2e-38
    %v386 = vlog2.pop %v385
    %v387 = vmul.f32 %v386, 0.6931472
    %v388 = vmul.f32 %v384, %v387
    %v389 = vadd.f32 %v366, %v384
    %v390 = vadd.f32 %v367, %v388
    %v391 = vsub.f32 %v23, 0.032258064
    %v392 = vsub.f32 %v24, 0.032258064
    %v393 = vmul.f32 %v391, %v391
    %v394 = vmul.f32 %v392, %v392
    %v395 = vmul.f32 %v393, -5000.0
    %v396 = vmul.f32 %v394, -5000.0
    %v397 = vmul.f32 %v395, 1.442695
    %v398 = vpow.pop %v397
    %v399 = vmul.f32 %v396, 1.442695
    %v400 = vpow.pop %v399
    %v401 = vadd.f32 %v398, %v400
    %v402 = vrot.slane %v401, 4
    %v403 = vadd.f32 %v401, %v402
    %v404 = vrot.slane %v403, 2
    %v405 = vadd.f32 %v403, %v404
    %v406 = vrot.slane %v405, 1
    %v407 = vadd.f32 %v405, %v406
    %v408 = vmax.f32 %v407, 1.2e-38
    %v409 = vlog2.pop %v408
    %v410 = vmul.f32 %v409, 0.6931472
    %v411 = vmul.f32 %v407, %v410
    %v412 = vadd.f32 %v389, %v407
    %v413 = vadd.f32 %v390, %v411
    %v414 = vsub.f32 %v23, 0.09677419
    %v415 = vsub.f32 %v24, 0.09677419
    %v416 = vmul.f32 %v414, %v414
    %v417 = vmul.f32 %v415, %v415
    %v418 = vmul.f32 %v416, -5000.0
    %v419 = vmul.f32 %v417, -5000.0
    %v420 = vmul.f32 %v418, 1.442695
    %v421 = vpow.pop %v420
    %v422 = vmul.f32 %v419, 1.442695
    %v423 = vpow.pop %v422
    %v424 = vadd.f32 %v421, %v423
    %v425 = vrot.slane %v424, 4
    %v426 = vadd.f32 %v424, %v425
    %v427 = vrot.slane %v426, 2
    %v428 = vadd.f32 %v426, %v427
    %v429 = vrot.slane %v428, 1
    %v430 = vadd.f32 %v428, %v429
    %v431 = vmax.f32 %v430, 1.2e-38
    %v432 = vlog2.pop %v431
    %v433 = vmul.f32 %v432, 0.6931472
    %v434 = vmul.f32 %v430, %v433
    %v435 = vadd.f32 %v412, %v430
    %v436 = vadd.f32 %v413, %v434
    %v437 = vsub.f32 %v23, 0.16129032
    %v438 = vsub.f32 %v24, 0.16129032
    %v439 = vmul.f32 %v437, %v437
    %v440 = vmul.f32 %v438, %v438
    %v441 = vmul.f32 %v439, -5000.0
    %v442 = vmul.f32 %v440, -5000.0
    %v443 = vmul.f32 %v441, 1.442695
    %v444 = vpow.pop %v443
    %v445 = vmul.f32 %v442, 1.442695
    %v446 = vpow.pop %v445
    %v447 = vadd.f32 %v444, %v446
    %v448 = vrot.slane %v447, 4
    %v449 = vadd.f32 %v447, %v448
    %v450 = vrot.slane %v449, 2
    %v451 = vadd.f32 %v449, %v450
    %v452 = vrot.slane %v451, 1
    %v453 = vadd.f32 %v451, %v452
    %v454 = vmax.f32 %v453, 1.2e-38
    %v455 = vlog2.pop %v454
    %v456 = vmul.f32 %v455, 0.6931472
    %v457 = vmul.f32 %v453, %v456
    %v458 = vadd.f32 %v435, %v453
    %v459 = vadd.f32 %v436, %v457
    %v460 = vsub.f32 %v23, 0.22580644
    %v461 = vsub.f32 %v24, 0.22580644
    %v462 = vmul.f32 %v460, %v460
    %v463 = vmul.f32 %v461, %v461
    %v464 = vmul.f32 %v462, -5000.0
    %v465 = vmul.f32 %v463, -5000.0
    %v466 = vmul.f32 %v464, 1.442695
    %v467 = vpow.pop %v466
    %v468 = vmul.f32 %v465, 1.442695
    %v469 = vpow.pop %v468
    %v470 = vadd.f32 %v467, %v469
    %v471 = vrot.slane %v470, 4
    %v472 = vadd.f32 %v470, %v471
    %v473 = vrot.slane %v472, 2
    %v474 = vadd.f32 %v472, %v473
    %v475 = vrot.slane %v474, 1
    %v476 = vadd.f32 %v474, %v475
    %v477 = vmax.f32 %v476, 1.2e-38
    %v478 = vlog2.pop %v477
    %v479 = vmul.f32 %v478, 0.6931472
    %v480 = vmul.f32 %v476, %v479
    %v481 = vadd.f32 %v458, %v476
    %v482 = vadd.f32 %v459, %v480
    %v483 = vsub.f32 %v23, 0.29032257
    %v484 = vsub.f32 %v24, 0.29032257
    %v485 = vmul.f32 %v483, %v483
    %v486 = vmul.f32 %v484, %v484
    %v487 = vmul.f32 %v485, -5000.0
    %v488 = vmul.f32 %v486, -5000.0
    %v489 = vmul.f32 %v487, 1.442695
    %v490 = vpow.pop %v489
    %v491 = vmul.f32 %v488, 1.442695
    %v492 = vpow.pop %v491
    %v493 = vadd.f32 %v490, %v492
    %v494 = vrot.slane %v493, 4
    %v495 = vadd.f32 %v493, %v494
    %v496 = vrot.slane %v495, 2
    %v497 = vadd.f32 %v495, %v496
    %v498 = vrot.slane %v497, 1
    %v499 = vadd.f32 %v497, %v498
    %v500 = vmax.f32 %v499, 1.2e-38
    %v501 = vlog2.pop %v500
    %v502 = vmul.f32 %v501, 0.6931472
    %v503 = vmul.f32 %v499, %v502
    %v504 = vadd.f32 %v481, %v499
    %v505 = vadd.f32 %v482, %v503
    %v506 = vsub.f32 %v23, 0.3548387
    %v507 = vsub.f32 %v24, 0.3548387
    %v508 = vmul.f32 %v506, %v506
    %v509 = vmul.f32 %v507, %v507
    %v510 = vmul.f32 %v508, -5000.0
    %v511 = vmul.f32 %v509, -5000.0
    %v512 = vmul.f32 %v510, 1.442695
    %v513 = vpow.pop %v512
    %v514 = vmul.f32 %v511, 1.442695
    %v515 = vpow.pop %v514
    %v516 = vadd.f32 %v513, %v515
    %v517 = vrot.slane %v516, 4
    %v518 = vadd.f32 %v516, %v517
    %v519 = vrot.slane %v518, 2
    %v520 = vadd.f32 %v518, %v519
    %v521 = vrot.slane %v520, 1
    %v522 = vadd.f32 %v520, %v521
    %v523 = vmax.f32 %v522, 1.2e-38
    %v524 = vlog2.pop %v523
    %v525 = vmul.f32 %v524, 0.6931472
    %v526 = vmul.f32 %v522, %v525
    %v527 = vadd.f32 %v504, %v522
    %v528 = vadd.f32 %v505, %v526
    %v529 = vsub.f32 %v23, 0.41935483
    %v530 = vsub.f32 %v24, 0.41935483
    %v531 = vmul.f32 %v529, %v529
    %v532 = vmul.f32 %v530, %v530
    %v533 = vmul.f32 %v531, -5000.0
    %v534 = vmul.f32 %v532, -5000.0
    %v535 = vmul.f32 %v533, 1.442695
    %v536 = vpow.pop %v535
    %v537 = vmul.f32 %v534, 1.442695
    %v538 = vpow.pop %v537
    %v539 = vadd.f32 %v536, %v538
    %v540 = vrot.slane %v539, 4
    %v541 = vadd.f32 %v539, %v540
    %v542 = vrot.slane %v541, 2
    %v543 = vadd.f32 %v541, %v542
    %v544 = vrot.slane %v543, 1
    %v545 = vadd.f32 %v543, %v544
    %v546 = vmax.f32 %v545, 1.2e-38
    %v547 = vlog2.pop %v546
    %v548 = vmul.f32 %v547, 0.6931472
    %v549 = vmul.f32 %v545, %v548
    %v550 = vadd.f32 %v527, %v545
    %v551 = vadd.f32 %v528, %v549
    %v552 = vsub.f32 %v23, 0.48387095
    %v553 = vsub.f32 %v24, 0.48387095
    %v554 = vmul.f32 %v552, %v552
    %v555 = vmul.f32 %v553, %v553
    %v556 = vmul.f32 %v554, -5000.0
    %v557 = vmul.f32 %v555, -5000.0
    %v558 = vmul.f32 %v556, 1.442695
    %v559 = vpow.pop %v558
    %v560 = vmul.f32 %v557, 1.442695
    %v561 = vpow.pop %v560
    %v562 = vadd.f32 %v559, %v561
    %v563 = vrot.slane %v562, 4
    %v564 = vadd.f32 %v562, %v563
    %v565 = vrot.slane %v564, 2
    %v566 = vadd.f32 %v564, %v565
    %v567 = vrot.slane %v566, 1
    %v568 = vadd.f32 %v566, %v567
    %v569 = vmax.f32 %v568, 1.2e-38
    %v570 = vlog2.pop %v569
    %v571 = vmul.f32 %v570, 0.6931472
    %v572 = vmul.f32 %v568, %v571
    %v573 = vadd.f32 %v550, %v568
    %v574 = vadd.f32 %v551, %v572
    %v575 = vsub.f32 %v23, 0.5483871
    %v576 = vsub.f32 %v24, 0.5483871
    %v577 = vmul.f32 %v575, %v575
    %v578 = vmul.f32 %v576, %v576
    %v579 = vmul.f32 %v577, -5000.0
    %v580 = vmul.f32 %v578, -5000.0
    %v581 = vmul.f32 %v579, 1.442695
    %v582 = vpow.pop %v581
    %v583 = vmul.f32 %v580, 1.442695
    %v584 = vpow.pop %v583
    %v585 = vadd.f32 %v582, %v584
    %v586 = vrot.slane %v585, 4
    %v587 = vadd.f32 %v585, %v586
    %v588 = vrot.slane %v587, 2
    %v589 = vadd.f32 %v587, %v588
    %v590 = vrot.slane %v589, 1
    %v591 = vadd.f32 %v589, %v590
    %v592 = vmax.f32 %v591, 1.2e-38
    %v593 = vlog2.pop %v592
    %v594 = vmul.f32 %v593, 0.6931472
    %v595 = vmul.f32 %v591, %v594
    %v596 = vadd.f32 %v573, %v591
    %v597 = vadd.f32 %v574, %v595
    %v598 = vsub.f32 %v23, 0.61290324
    %v599 = vsub.f32 %v24, 0.61290324
    %v600 = vmul.f32 %v598, %v598
    %v601 = vmul.f32 %v599, %v599
    %v602 = vmul.f32 %v600, -5000.0
    %v603 = vmul.f32 %v601, -5000.0
    %v604 = vmul.f32 %v602, 1.442695
    %v605 = vpow.pop %v604
    %v606 = vmul.f32 %v603, 1.442695
    %v607 = vpow.pop %v606
    %v608 = vadd.f32 %v605, %v607
    %v609 = vrot.slane %v608, 4
    %v610 = vadd.f32 %v608, %v609
    %v611 = vrot.slane %v610, 2
    %v612 = vadd.f32 %v610, %v611
    %v613 = vrot.slane %v612, 1
    %v614 = vadd.f32 %v612, %v613
    %v615 = vmax.f32 %v614, 1.2e-38
    %v616 = vlog2.pop %v615
    %v617 = vmul.f32 %v616, 0.6931472
    %v618 = vmul.f32 %v614, %v617
    %v619 = vadd.f32 %v596, %v614
    %v620 = vadd.f32 %v597, %v618
    %v621 = vsub.f32 %v23, 0.67741936
    %v622 = vsub.f32 %v24, 0.67741936
    %v623 = vmul.f32 %v621, %v621
    %v624 = vmul.f32 %v622, %v622
    %v625 = vmul.f32 %v623, -5000.0
    %v626 = vmul.f32 %v624, -5000.0
    %v627 = vmul.f32 %v625, 1.442695
    %v628 = vpow.pop %v627
    %v629 = vmul.f32 %v626, 1.442695
    %v630 = vpow.pop %v629
    %v631 = vadd.f32 %v628, %v630
    %v632 = vrot.slane %v631, 4
    %v633 = vadd.f32 %v631, %v632
    %v634 = vrot.slane %v633, 2
    %v635 = vadd.f32 %v633, %v634
    %v636 = vrot.slane %v635, 1
    %v637 = vadd.f32 %v635, %v636
    %v638 = vmax.f32 %v637, 1.2e-38
    %v639 = vlog2.pop %v638
    %v640 = vmul.f32 %v639, 0.6931472
    %v641 = vmul.f32 %v637, %v640
    %v642 = vadd.f32 %v619, %v637
    %v643 = vadd.f32 %v620, %v641
    %v644 = vsub.f32 %v23, 0.7419355
    %v645 = vsub.f32 %v24, 0.7419355
    %v646 = vmul.f32 %v644, %v644
    %v647 = vmul.f32 %v645, %v645
    %v648 = vmul.f32 %v646, -5000.0
    %v649 = vmul.f32 %v647, -5000.0
    %v650 = vmul.f32 %v648, 1.442695
    %v651 = vpow.pop %v650
    %v652 = vmul.f32 %v649, 1.442695
    %v653 = vpow.pop %v652
    %v654 = vadd.f32 %v651, %v653
    %v655 = vrot.slane %v654, 4
    %v656 = vadd.f32 %v654, %v655
    %v657 = vrot.slane %v656, 2
    %v658 = vadd.f32 %v656, %v657
    %v659 = vrot.slane %v658, 1
    %v660 = vadd.f32 %v658, %v659
    %v661 = vmax.f32 %v660, 1.2e-38
    %v662 = vlog2.pop %v661
    %v663 = vmul.f32 %v662, 0.6931472
    %v664 = vmul.f32 %v660, %v663
    %v665 = vadd.f32 %v642, %v660
    %v666 = vadd.f32 %v643, %v664
    %v667 = vsub.f32 %v23, 0.8064516
    %v668 = vsub.f32 %v24, 0.8064516
    %v669 = vmul.f32 %v667, %v667
    %v670 = vmul.f32 %v668, %v668
    %v671 = vmul.f32 %v669, -5000.0
    %v672 = vmul.f32 %v670, -5000.0
    %v673 = vmul.f32 %v671, 1.442695
    %v674 = vpow.pop %v673
    %v675 = vmul.f32 %v672, 1.442695
    %v676 = vpow.pop %v675
    %v677 = vadd.f32 %v674, %v676
    %v678 = vrot.slane %v677, 4
    %v679 = vadd.f32 %v677, %v678
    %v680 = vrot.slane %v679, 2
    %v681 = vadd.f32 %v679, %v680
    %v682 = vrot.slane %v681, 1
    %v683 = vadd.f32 %v681, %v682
    %v684 = vmax.f32 %v683, 1.2e-38
    %v685 = vlog2.pop %v684
    %v686 = vmul.f32 %v685, 0.6931472
    %v687 = vmul.f32 %v683, %v686
    %v688 = vadd.f32 %v665, %v683
    %v689 = vadd.f32 %v666, %v687
    %v690 = vsub.f32 %v23, 0.87096775
    %v691 = vsub.f32 %v24, 0.87096775
    %v692 = vmul.f32 %v690, %v690
    %v693 = vmul.f32 %v691, %v691
    %v694 = vmul.f32 %v692, -5000.0
    %v695 = vmul.f32 %v693, -5000.0
    %v696 = vmul.f32 %v694, 1.442695
    %v697 = vpow.pop %v696
    %v698 = vmul.f32 %v695, 1.442695
    %v699 = vpow.pop %v698
    %v700 = vadd.f32 %v697, %v699
    %v701 = vrot.slane %v700, 4
    %v702 = vadd.f32 %v700, %v701
    %v703 = vrot.slane %v702, 2
    %v704 = vadd.f32 %v702, %v703
    %v705 = vrot.slane %v704, 1
    %v706 = vadd.f32 %v704, %v705
    %v707 = vmax.f32 %v706, 1.2e-38
    %v708 = vlog2.pop %v707
    %v709 = vmul.f32 %v708, 0.6931472
    %v710 = vmul.f32 %v706, %v709
    %v711 = vadd.f32 %v688, %v706
    %v712 = vadd.f32 %v689, %v710
    %v713 = vsub.f32 %v23, 0.9354839
    %v714 = vsub.f32 %v24, 0.9354839
    %v715 = vmul.f32 %v713, %v713
    %v716 = vmul.f32 %v714, %v714
    %v717 = vmul.f32 %v715, -5000.0
    %v718 = vmul.f32 %v716, -5000.0
    %v719 = vmul.f32 %v717, 1.442695
    %v720 = vpow.pop %v719
    %v721 = vmul.f32 %v718, 1.442695
    %v722 = vpow.pop %v721
    %v723 = vadd.f32 %v720, %v722
    %v724 = vrot.slane %v723, 4
    %v725 = vadd.f32 %v723, %v724
    %v726 = vrot.slane %v725, 2
    %v727 = vadd.f32 %v725, %v726
    %v728 = vrot.slane %v727, 1
    %v729 = vadd.f32 %v727, %v728
    %v730 = vmax.f32 %v729, 1.2e-38
    %v731 = vlog2.pop %v730
    %v732 = vmul.f32 %v731, 0.6931472
    %v733 = vmul.f32 %v729, %v732
    %v734 = vadd.f32 %v711, %v729
    %v735 = vadd.f32 %v712, %v733
    %v736 = vsub.f32 %v23, 1.0
    %v737 = vsub.f32 %v24, 1.0
    %v738 = vmul.f32 %v736, %v736
    %v739 = vmul.f32 %v737, %v737
    %v740 = vmul.f32 %v738, -5000.0
    %v741 = vmul.f32 %v739, -5000.0
    %v742 = vmul.f32 %v740, 1.442695
    %v743 = vpow.pop %v742
    %v744 = vmul.f32 %v741, 1.442695
    %v745 = vpow.pop %v744
    %v746 = vadd.f32 %v743, %v745
    %v747 = vrot.slane %v746, 4
    %v748 = vadd.f32 %v746, %v747
    %v749 = vrot.slane %v748, 2
    %v750 = vadd.f32 %v748, %v749
    %v751 = vrot.slane %v750, 1
    %v752 = vadd.f32 %v750, %v751
    %v753 = vmax.f32 %v752, 1.2e-38
    %v754 = vlog2.pop %v753
    %v755 = vmul.f32 %v754, 0.6931472
    %v756 = vmul.f32 %v752, %v755
    %v757 = vadd.f32 %v734, %v752
    %v758 = vadd.f32 %v735, %v756
    %v759 = vmax.f32 %v757, 1.2e-38
    %v760 = vlog2.pop %v759
    %v761 = vmul.f32 %v760, 0.6931472
    %v762 = vrcp.pop %v759
    %v763 = vmul.f32 %v758, %v762
    %v764 = vsub.f32 %v761, %v763
    %vm765 = vcmp.gt.f32.partialorder %v757, 0.0
    %v766 = vsel %vm765, %v764, 0.0
    %767 = vst [vmem:[#allocation5] sm:$0x1] %v766
    // Predicated region
    $region10: #{tpu_custom_call.1} parent=1 // pred_check
      _
    $region11: #{tpu_custom_call.1} parent=1 // pred_check_branch
      %769 = sbr.rel (0) target = $region13
    $region12: #{tpu_custom_call.1} parent=1 // pred_region
      %s771 = ssub.s32 16, 16
      %772 = vsyncadd [#allocation4], %s771
      %s774 = sshll.u32 [#allocation5], 4
      %s775 = int_to_ptr.vmem [resolvable:$true] %s774
      %777 = dma.vmem_to_hbm [thread:$0]  %s775, 16, %s1, [#allocation4]
    $region13: #{tpu_custom_call.1} parent=1 // pred_fallthru
      _
    // Predicated region
    $region14: #{tpu_custom_call.1} parent=1 // pred_check
      _
    $region15: #{tpu_custom_call.1} parent=1 // pred_check_branch
      %779 = sbr.rel (0) target = $region17
    $region16: #{tpu_custom_call.1} parent=1 // pred_region
      %780 = dma.done [#allocation4], 16
    $region17: #{tpu_custom_call.1} parent=1 // pred_fallthru
      _
    %781 = vsyncpa [#allocation3], 1
    %782 = vsyncpa [#allocation4], 1

</llo_original>
